<compile_context>
chip_gen: v5e
topology: v5e:2x2
jax: 0.10.0
libtpu: 0.0.40
codegen_flags: <defaults>
</compile_context>

<pallas_src>
import functools

import jax
import jax.numpy as jnp
from jax.experimental import pallas as pl
from jax.experimental.pallas import tpu as pltpu


def _focal_loss_kernel(logits_ref, targets_ref, alpha_ref, out_ref, *,
                       gamma: float, n_rows: int, tile_n: int, inner_tiles: int):
    p = pl.program_id(0)   # batch-half (sharded across TensorCores on v7x)
    i = pl.program_id(1)   # tile within this half (sequential reduction)

    @pl.when(i == 0)
    def _():
        out_ref[...] = jnp.zeros_like(out_ref)

    x = logits_ref[...].astype(jnp.float32)        # (TILE_N, C)
    t = targets_ref[...]                           # (TILE_N, 1) int32
    a = alpha_ref[...].astype(jnp.float32)         # (1, C)

    # Stable softmax pieces; only the target-class probability is needed, so the
    # full (TILE_N, C) tile is never normalized.
    m = jnp.max(x, axis=1, keepdims=True)          # (TILE_N, 1)
    e = jnp.exp(x - m)                             # (TILE_N, C)
    row_sum = jnp.sum(e, axis=1, keepdims=True)    # (TILE_N, 1)

    # One-hot class mask via broadcasted iota (scatter_ equivalent); reused for
    # both the target-probability gather and the alpha gather.
    col = jax.lax.broadcasted_iota(jnp.int32, x.shape, 1)
    mask = (col == t).astype(jnp.float32)          # (TILE_N, C)

    e_t = jnp.sum(e * mask, axis=1, keepdims=True)        # (TILE_N, 1)
    alpha_n = jnp.sum(a * mask, axis=1, keepdims=True)    # (TILE_N, 1)

    # probs == (P*class_mask).sum(1)+1e-8; divide replaced by EUP approx
    # reciprocal + VPU multiply (frees the VPU divide).
    probs = e_t * pl.reciprocal(row_sum, approx=True) + 1e-8
    log_p = jnp.log(probs) + 1e-8                  # eps outside the log, as in ref

    # Focal weight (1 - p)^gamma: multiply chain for small integer gamma (VPU)
    # instead of pow (= exp(gamma*log)) on the single-slot EUP.
    d = 1.0 - probs
    g = float(gamma)
    if g == int(g) and 0 <= int(g) <= 16:
        ig = int(g)
        w = jnp.ones_like(d) if ig == 0 else d
        for _ in range(max(ig - 1, 0)):
            w = w * d
    else:
        w = jnp.power(d, g)

    batch_loss = -alpha_n * w * log_p              # (TILE_N, 1)

    # Mask padded tail rows and phantom (clamped-index) tiles by *logical* row id.
    tile_idx = p * inner_tiles + i
    row = tile_idx * tile_n + jax.lax.broadcasted_iota(jnp.int32, batch_loss.shape, 0)
    batch_loss = jnp.where(row < n_rows, batch_loss, 0.0)

    # Per-core partial sum, accumulated into the resident (8,128) output block.
    out_ref[...] += jnp.sum(batch_loss)


def _vmem_limit_bytes() -> int:
    """Generation-aware scoped-VMEM limit (v5e/v6e: 128 MiB physical -> 64 MiB;
    v7x: 64 MiB physical -> 32 MiB)."""
    try:
        cap = int(pltpu.get_tpu_info().vmem_capacity_bytes)
    except Exception:
        cap = 64 * 1024 * 1024
    return 64 * 1024 * 1024 if cap >= 96 * 1024 * 1024 else 32 * 1024 * 1024


def _pick_tile_n(n: int, c: int, itemsize: int, vmem_limit: int) -> int:
    """Largest tile_n whose double-buffered (logits + targets) footprint fits the
    scoped-VMEM limit with headroom, in units of the dtype's sublane granule."""
    lanes = max(((c + 127) // 128) * 128, 128)
    logits_row = lanes * itemsize              # lane-padded VMEM bytes per logits row
    targets_row = 128 * 4                      # (tile_n,1) int32 pads to 128 lanes
    per_row = 2 * (logits_row + targets_row)   # x2: double-buffered input pipeline
    budget = max(vmem_limit - 8 * 1024 * 1024, 4 * 1024 * 1024)
    granule = max(8, 32 // itemsize)           # 8 for f32, 16 for bf16
    cap = budget // per_row
    cap = max(granule, (cap // granule) * granule)
    return n if n <= cap else int(cap)


def focal_loss(inputs, targets, alpha=None, gamma=2.0, size_average=True,
               tile_n=None):
    """inputs: (N, C) float logits; targets: (N,) int class ids."""
    n, c = inputs.shape
    itemsize = jnp.dtype(inputs.dtype).itemsize
    if alpha is None:
        alpha = jnp.ones((c,), dtype=jnp.float32)   # matches torch.ones(class_num, 1)
    alpha2d = jnp.asarray(alpha, dtype=jnp.float32).reshape(1, c)
    targets2d = jnp.asarray(targets, dtype=jnp.int32).reshape(n, 1)

    vmem_limit = _vmem_limit_bytes()
    if tile_n is None:
        tile_n = _pick_tile_n(n, c, itemsize, vmem_limit)
    granule = max(8, 32 // itemsize)
    if tile_n != n and tile_n % granule != 0:
        raise ValueError(
            f"tile_n must equal N or be a multiple of {granule} for dtype {inputs.dtype}")

    total_tiles = pl.cdiv(n, tile_n)
    num_splits = 2                                   # 2 TensorCores on v7x; no-op cost elsewhere
    inner_tiles = pl.cdiv(total_tiles, num_splits)

    kernel = functools.partial(_focal_loss_kernel,
                               gamma=float(gamma),
                               n_rows=n,
                               tile_n=tile_n,
                               inner_tiles=inner_tiles)

    def _tile_map(p, i):
        # Clamp so an odd total_tiles never indexes past the last block; the
        # duplicated rows are zeroed in-kernel by the logical-row mask.
        return (jnp.minimum(p * inner_tiles + i, total_tiles - 1), 0)

    out = pl.pallas_call(
        kernel,
        # (8,128)-aligned partial-sum slab per batch half -> unmasked lane-dense
        # stores and a private accumulator block per TensorCore.
        out_shape=jax.ShapeDtypeStruct((num_splits * 8, 128), jnp.float32),
        grid_spec=pltpu.PrefetchScalarGridSpec(
            num_scalar_prefetch=0,
            grid=(num_splits, inner_tiles),
            in_specs=[
                pl.BlockSpec((tile_n, c), _tile_map),      # logits tile
                pl.BlockSpec((tile_n, 1), _tile_map),      # targets tile
                pl.BlockSpec((1, c), lambda p, i: (0, 0)),  # alpha (resident)
            ],
            out_specs=pl.BlockSpec((8, 128), lambda p, i: (p, 0)),
        ),
        compiler_params=pltpu.CompilerParams(
            dimension_semantics=("parallel", "arbitrary"),
            vmem_limit_bytes=vmem_limit,
        ),
    )(inputs, targets2d, alpha2d)

    total = jnp.sum(out[0::8, 0])                    # combine per-core partials
    if size_average:
        total = total / jnp.float32(n)
    return total + 1e-8


def _reference_focal_loss(inputs, targets, alpha, gamma, size_average):
    p = jax.nn.softmax(inputs.astype(jnp.float32), axis=1)
    mask = jax.nn.one_hot(targets, inputs.shape[1], dtype=jnp.float32)
    probs = jnp.sum(p * mask, axis=1, keepdims=True) + 1e-8
    log_p = jnp.log(probs) + 1e-8
    a = alpha[targets].reshape(-1, 1)
    bl = -a * jnp.power(1.0 - probs, gamma) * log_p
    loss = jnp.mean(bl) if size_average else jnp.sum(bl)
    return loss + 1e-8


if __name__ == "__main__":
    key = jax.random.PRNGKey(0)
    C = 16
    k1, k2, k3, k4, k5, k6 = jax.random.split(key, 6)
    alpha = jnp.ones((C,), dtype=jnp.float32)   # deterministic init (default alpha=None)

    # Tolerances deliberately loosened vs f32-exact because of the EUP approx
    # reciprocal used for the softmax denominator (review-sanctioned).
    RTOL, ATOL = 5e-3, 1e-5

    # Case 1: single tile per half (grid (2,1)), mean reduction — batch=8, class_num=16.
    N1 = 8
    logits1 = jax.random.normal(k1, (N1, C), dtype=jnp.float32)
    targets1 = jax.random.randint(k2, (N1,), 0, C, dtype=jnp.int32)
    loss1 = jax.block_until_ready(
        focal_loss(logits1, targets1, alpha=alpha, gamma=2.0, size_average=True))
    ref1 = _reference_focal_loss(logits1, targets1, alpha, 2.0, True)
    assert jnp.allclose(loss1, ref1, rtol=RTOL, atol=ATOL), (loss1, ref1)

    # Case 2: multi-step grid with a padded tail tile (N=30, TILE_N=8), sum reduction.
    N2 = 30
    logits2 = jax.random.normal(k3, (N2, C), dtype=jnp.float32)
    targets2 = jax.random.randint(k4, (N2,), 0, C, dtype=jnp.int32)
    loss2 = jax.block_until_ready(
        focal_loss(logits2, targets2, alpha=alpha, gamma=2.0, size_average=False,
                   tile_n=8))
    ref2 = _reference_focal_loss(logits2, targets2, alpha, 2.0, False)
    assert jnp.allclose(loss2, ref2, rtol=RTOL, atol=ATOL), (loss2, ref2)

    # Case 3: bf16 logits, odd tile count (N=40, TILE_N=16 -> 3 tiles, so the
    # second half hits the clamped phantom-tile path), mean reduction.
    N3 = 40
    logits3 = jax.random.normal(k5, (N3, C), dtype=jnp.float32).astype(jnp.bfloat16)
    targets3 = jax.random.randint(k6, (N3,), 0, C, dtype=jnp.int32)
    loss3 = jax.block_until_ready(
        focal_loss(logits3, targets3, alpha=alpha, gamma=2.0, size_average=True,
                   tile_n=16))
    ref3 = _reference_focal_loss(logits3, targets3, alpha, 2.0, True)
    assert jnp.allclose(loss3, ref3, rtol=RTOL, atol=ATOL), (loss3, ref3)

    print("KERNEL_OK")
</pallas_src>

<mosaic_0001>
module attributes {stable_mosaic.version = 11 : i64} {
  func.func @_focal_loss_kernel(%arg0: i32, %arg1: i32, %arg2: memref<8x16xf32, #tpu.memory_space<vmem>>, %arg3: memref<8x1xi32, #tpu.memory_space<vmem>>, %arg4: memref<1x16xf32, #tpu.memory_space<vmem>>, %arg5: memref<8x128xf32, #tpu.memory_space<vmem>>) attributes {dimension_semantics = [#tpu.dimension_semantics<parallel>, #tpu.dimension_semantics<arbitrary>], iteration_bounds = array<i64: 2, 1>, scalar_prefetch = 0 : i64, scratch_operands = 0 : i64, tpu.core_type = #tpu.core_type<tc>, window_params = [{transform_indices = @transform_0, window_bounds = array<i64: 8, 16>}, {transform_indices = @transform_1, window_bounds = array<i64: 8, 1>}, {pipeline_mode = #tpu.pipeline_mode<synchronous>, transform_indices = @transform_2, window_bounds = array<i64: 1, 16>}, {transform_indices = @transform_3, window_bounds = array<i64: 8, 128>}]} {
    %c0_i32 = arith.constant 0 : i32
    %0 = arith.cmpi eq, %arg1, %c0_i32 : i32
    %1 = arith.extui %0 : i1 to i32
    %c0_i32_0 = arith.constant 0 : i32
    %2 = arith.cmpi ne, %1, %c0_i32_0 : i32
    scf.if %2 {
      %cst_20 = arith.constant 0.000000e+00 : f32
      %57 = vector.broadcast %cst_20 : f32 to vector<8x128xf32>
      %c0_21 = arith.constant 0 : index
      %c0_22 = arith.constant 0 : index
      %58 = vector.load %arg5[%c0_21, %c0_22] : memref<8x128xf32, #tpu.memory_space<vmem>>, vector<8x128xf32>
      tpu.vector_store %arg5[%c0_21, %c0_22], %57 {strides = array<i32>} : memref<8x128xf32, #tpu.memory_space<vmem>>, vector<8x128xf32>,
    } else {
    }
    %c0 = arith.constant 0 : index
    %c0_1 = arith.constant 0 : index
    %3 = vector.load %arg2[%c0, %c0_1] : memref<8x16xf32, #tpu.memory_space<vmem>>, vector<8x16xf32>
    %c0_2 = arith.constant 0 : index
    %c0_3 = arith.constant 0 : index
    %4 = vector.load %arg3[%c0_2, %c0_3] : memref<8x1xi32, #tpu.memory_space<vmem>>, vector<8x1xi32>
    %c0_4 = arith.constant 0 : index
    %c0_5 = arith.constant 0 : index
    %5 = vector.load %arg4[%c0_4, %c0_5] : memref<1x16xf32, #tpu.memory_space<vmem>>, vector<1x16xf32>
    %cst = arith.constant dense<0xFF800000> : vector<8xf32>
    %6 = vector.multi_reduction <maximumf>, %3, %cst [1] : vector<8x16xf32> to vector<8xf32>
    %7 = vector.shape_cast %6 : vector<8xf32> to vector<8x1xf32>
    %8 = vector.broadcast %7 : vector<8x1xf32> to vector<8x16xf32>
    %9 = arith.subf %3, %8 : vector<8x16xf32>
    %10 = math.exp %9 : vector<8x16xf32>
    %cst_6 = arith.constant dense<0.000000e+00> : vector<8xf32>
    %11 = vector.multi_reduction <add>, %10, %cst_6 [1] : vector<8x16xf32> to vector<8xf32>
    %12 = vector.shape_cast %11 : vector<8xf32> to vector<8x1xf32>
    %13 = tpu.iota {dimensions = array<i32: 1>} : vector<8x16xi32>
    %14 = vector.broadcast %4 : vector<8x1xi32> to vector<8x16xi32>
    %15 = arith.cmpi eq, %13, %14 : vector<8x16xi32>
    %16 = arith.extui %15 : vector<8x16xi1> to vector<8x16xi32>
    %17 = arith.sitofp %16 : vector<8x16xi32> to vector<8x16xf32>
    %18 = arith.mulf %10, %17 : vector<8x16xf32>
    %cst_7 = arith.constant dense<0.000000e+00> : vector<8xf32>
    %19 = vector.multi_reduction <add>, %18, %cst_7 [1] : vector<8x16xf32> to vector<8xf32>
    %20 = vector.shape_cast %19 : vector<8xf32> to vector<8x1xf32>
    %21 = vector.broadcast %5 : vector<1x16xf32> to vector<8x16xf32>
    %22 = arith.mulf %21, %17 : vector<8x16xf32>
    %cst_8 = arith.constant dense<0.000000e+00> : vector<8xf32>
    %23 = vector.multi_reduction <add>, %22, %cst_8 [1] : vector<8x16xf32> to vector<8xf32>
    %24 = vector.shape_cast %23 : vector<8xf32> to vector<8x1xf32>
    %25 = tpu.reciprocal %12 {approx = true} : vector<8x1xf32> -> vector<8x1xf32>
    %26 = arith.mulf %20, %25 : vector<8x1xf32>
    %cst_9 = arith.constant 9.99999993E-9 : f32
    %27 = vector.broadcast %cst_9 : f32 to vector<8x1xf32>
    %28 = arith.addf %26, %27 : vector<8x1xf32>
    %29 = math.log %28 : vector<8x1xf32>
    %cst_10 = arith.constant 9.99999993E-9 : f32
    %30 = vector.broadcast %cst_10 : f32 to vector<8x1xf32>
    %31 = arith.addf %29, %30 : vector<8x1xf32>
    %cst_11 = arith.constant 1.000000e+00 : f32
    %32 = vector.broadcast %cst_11 : f32 to vector<8x1xf32>
    %33 = arith.subf %32, %28 : vector<8x1xf32>
    %34 = arith.mulf %33, %33 : vector<8x1xf32>
    %cst_12 = arith.constant 0.000000e+00 : f32
    %35 = vector.broadcast %cst_12 : f32 to vector<8x1xf32>
    %36 = arith.subf %35, %24 : vector<8x1xf32>
    %37 = arith.mulf %36, %34 : vector<8x1xf32>
    %38 = arith.mulf %37, %31 : vector<8x1xf32>
    %c1_i32 = arith.constant 1 : i32
    %39 = arith.muli %arg0, %c1_i32 : i32
    %40 = arith.addi %39, %arg1 : i32
    %c8_i32 = arith.constant 8 : i32
    %41 = arith.muli %40, %c8_i32 : i32
    %42 = tpu.iota {dimensions = array<i32: 0>} : vector<8x1xi32>
    %43 = vector.broadcast %41 : i32 to vector<8x1xi32>
    %44 = arith.addi %43, %42 : vector<8x1xi32>
    %c8_i32_13 = arith.constant 8 : i32
    %45 = vector.broadcast %c8_i32_13 : i32 to vector<8x1xi32>
    %46 = arith.cmpi slt, %44, %45 : vector<8x1xi32>
    %cst_14 = arith.constant 0.000000e+00 : f32
    %47 = vector.broadcast %cst_14 : f32 to vector<8x1xf32>
    %48 = arith.select %46, %38, %47 : vector<8x1xi1>, vector<8x1xf32>
    %c0_15 = arith.constant 0 : index
    %c0_16 = arith.constant 0 : index
    %49 = vector.load %arg5[%c0_15, %c0_16] : memref<8x128xf32, #tpu.memory_space<vmem>>, vector<8x128xf32>
    %50 = vector.shape_cast %48 : vector<8x1xf32> to vector<1x8x1xf32>
    %cst_17 = arith.constant dense<0.000000e+00> : vector<1xf32>
    %51 = vector.multi_reduction <add>, %50, %cst_17 [1, 2] : vector<1x8x1xf32> to vector<1xf32>
    %52 = vector.shape_cast %51 : vector<1xf32> to vector<1x1x1xf32>
    %53 = vector.extract %52[0, 0, 0] : f32 from vector<1x1x1xf32>
    %54 = vector.broadcast %53 : f32 to vector<8x128xf32>
    %55 = arith.addf %49, %54 : vector<8x128xf32>
    %c0_18 = arith.constant 0 : index
    %c0_19 = arith.constant 0 : index
    %56 = vector.load %arg5[%c0_18, %c0_19] : memref<8x128xf32, #tpu.memory_space<vmem>>, vector<8x128xf32>
    tpu.vector_store %arg5[%c0_18, %c0_19], %55 {strides = array<i32>} : memref<8x128xf32, #tpu.memory_space<vmem>>, vector<8x128xf32>,
    return
  }
  func.func @transform_0(%arg0: i32, %arg1: i32) -> (i32, i32) {
    %c1_i32 = arith.constant 1 : i32
    %0 = arith.muli %arg0, %c1_i32 : i32
    %1 = arith.addi %0, %arg1 : i32
    %c0_i32 = arith.constant 0 : i32
    %2 = arith.minsi %1, %c0_i32 : i32
    %c0_i32_0 = arith.constant 0 : i32
    %c0_i32_1 = arith.constant 0 : i32
    return %2, %c0_i32_0 : i32, i32
  }
  func.func @transform_1(%arg0: i32, %arg1: i32) -> (i32, i32) {
    %c1_i32 = arith.constant 1 : i32
    %0 = arith.muli %arg0, %c1_i32 : i32
    %1 = arith.addi %0, %arg1 : i32
    %c0_i32 = arith.constant 0 : i32
    %2 = arith.minsi %1, %c0_i32 : i32
    %c0_i32_0 = arith.constant 0 : i32
    %c0_i32_1 = arith.constant 0 : i32
    return %2, %c0_i32_0 : i32, i32
  }
  func.func @transform_2(%arg0: i32, %arg1: i32) -> (i32, i32) {
    %c0_i32 = arith.constant 0 : i32
    %c0_i32_0 = arith.constant 0 : i32
    %c0_i32_1 = arith.constant 0 : i32
    return %c0_i32, %c0_i32_0 : i32, i32
  }
  func.func @transform_3(%arg0: i32, %arg1: i32) -> (i32, i32) {
    %c0_i32 = arith.constant 0 : i32
    %c0_i32_0 = arith.constant 0 : i32
    return %arg0, %c0_i32 : i32, i32
  }
}

</mosaic_0001>

<llo_original>
// kernel: tpu_custom_call.1
$region0: #{tpu_custom_call.1}
  #allocation0 [shape = 'u32[]', space=smem, size = 0x4, offset = 0x4, fixed_abs, tag = 'smem constant byte address 0x4 - core index']
  #allocation1 [shape = 'u32[72,128]{1,0:T(1,128)}', space=vmem, size = 0x9000, scoped, tag = 'internal scratch']
  %s0 = inlined_call_operand.vmem [shape: f32[8,16], index: 0, kind: input, shape index: {}]
  %s1 = inlined_call_operand.vmem [shape: s32[8,1], index: 1, kind: input, shape index: {}]
  %s2 = inlined_call_operand.vmem [shape: f32[1,16], index: 2, kind: input, shape index: {}]
  %s3 = inlined_call_operand.hbm [shape: f32[16,128], index: 3, kind: output, shape index: {}]
  %s4 = sld [smem:[#allocation0]]
  $region49: #{tpu_custom_call.1} parent=0
    _
  %s6 = ssub.s32 1, %s4
  %s7 = scalar_select 0, %s6, %s4
  $region1: #{tpu_custom_call.1} parent=0
    #allocation2 [shape = 'u8[8192]{0}', space=vmem, size = 0x2000, scoped, tag = 'output window, operand 0']
    #allocation3 [shape = 's32[2]{0}', space=sflag, size = 0x8, scoped, tag = 'scoped memory for tpu_custom_call.1']
    %8 = vsyncpa [#allocation3], 0
    %s9 = scalar_lea.sflag [#allocation3], 1
    %10 = vsyncpa %s9, 0
    loop: start=0, step=1, limit=4
    $region2: #{tpu_custom_call.1} parent=1 // loop_pre_header
      _
    $region3: #{tpu_custom_call.1} parent=1 // loop_header
      %s12 = sphi 0, %s16
      %p13 = scmp.ge.s32.totalorder %s12, 4
      %s19 = sphi 0, %s31
      %s20 = sphi 0, %s27
      %s21 = sphi 0, %s19
      %s22 = sphi 0, %s20
      %s23 = sphi 0, %s21
      %s24 = sphi 0, %s22
      %s40 = sphi 0, %s42
      %s43 = sphi 0, %s40
      %s44 = sphi 0, %s43
      %s60 = sphi 0, %s44
      %s72 = sphi 0, %s74
      %s75 = sphi 0, %s72
      %s76 = sphi 0, %s75
      %s92 = sphi 0, %s76
      %s96 = sphi 0, %s96
      %s98 = sphi 0, %s96
      %s99 = sphi 0, %s98
      %s113 = sphi 0, %s99
      %s119 = sphi 0, %s121
      %s122 = sphi 0, %s119
      %s123 = sphi 0, %s122
      %s139 = sphi 0, %s123
    $region4: #{tpu_custom_call.1} parent=1 // loop_header_branch
      %15 = sbr.rel (%p13) target = $region8
    $region5: #{tpu_custom_call.1} parent=1 // loop_body
      %s17 = ssub.s32 %s12, 1
      %s18 = ssub.s32 %s12, 2
      %s25 = sadd.s32 1, %s20
      %p26 = scmp.ge.s32.totalorder %s25, 1
      %s27 = scalar_select %p26, 0, %s25
      %s28 = sadd.s32 1, %s19
      %s29 = scalar_select %p26, %s28, %s19
      %p30 = scmp.ge.s32.totalorder %s29, 2
      %s31 = scalar_select %p30, 0, %s29
      %s32 = sadd.s32 %s19, %s20
      %p33 = scmp.lt.s32.totalorder %s32, 0
      %s34 = scalar_select %p33, %s32, 0
      %s35 = sadd.s32 %s31, %s27
      %p36 = scmp.lt.s32.totalorder %s35, 0
      %s37 = scalar_select %p36, %s35, 0
      %s38 = ssub.s32 %s34, %s37
      %p39 = scmp.eq.s32.totalorder %s38, 0
      %s41 = sadd.s32 %s40, 1
      %s42 = scalar_select %p39, %s40, %s41
      %p45 = pneg %p39
      %p46 = scmp.eq.s32.totalorder %s12, 1
      %p47 = por %p45, %p46
      %p48 = scmp.ne.s32.totalorder %s40, %s43
      %p49 = scmp.eq.s32.totalorder %s12, 0
      %p50 = por %p48, %p49
      %p51 = scmp.ne.s32.totalorder %s40, %s43
      %p52 = scmp.eq.s32.totalorder %s17, 1
      %p53 = por %p51, %p52
      %p54 = scmp.ne.s32.totalorder %s43, %s44
      %p55 = scmp.eq.s32.totalorder %s17, 0
      %p56 = por %p54, %p55
      %p57 = scmp.ne.s32.totalorder %s43, %s44
      %p58 = scmp.eq.s32.totalorder %s18, 1
      %p59 = por %p57, %p58
      %p61 = scmp.ne.s32.totalorder %s44, %s60
      %p62 = scmp.eq.s32.totalorder %s18, 0
      %p63 = por %p61, %p62
      %s64 = sadd.s32 %s19, %s20
      %p65 = scmp.lt.s32.totalorder %s64, 0
      %s66 = scalar_select %p65, %s64, 0
      %s67 = sadd.s32 %s31, %s27
      %p68 = scmp.lt.s32.totalorder %s67, 0
      %s69 = scalar_select %p68, %s67, 0
      %s70 = ssub.s32 %s66, %s69
      %p71 = scmp.eq.s32.totalorder %s70, 0
      %s73 = sadd.s32 %s72, 1
      %s74 = scalar_select %p71, %s72, %s73
      %p77 = pneg %p71
      %p78 = scmp.eq.s32.totalorder %s12, 1
      %p79 = por %p77, %p78
      %p80 = scmp.ne.s32.totalorder %s72, %s75
      %p81 = scmp.eq.s32.totalorder %s12, 0
      %p82 = por %p80, %p81
      %p83 = scmp.ne.s32.totalorder %s72, %s75
      %p84 = scmp.eq.s32.totalorder %s17, 1
      %p85 = por %p83, %p84
      %p86 = scmp.ne.s32.totalorder %s75, %s76
      %p87 = scmp.eq.s32.totalorder %s17, 0
      %p88 = por %p86, %p87
      %p89 = scmp.ne.s32.totalorder %s75, %s76
      %p90 = scmp.eq.s32.totalorder %s18, 1
      %p91 = por %p89, %p90
      %p93 = scmp.ne.s32.totalorder %s76, %s92
      %p94 = scmp.eq.s32.totalorder %s18, 0
      %p95 = por %p93, %p94
      %s97 = sadd.s32 %s96, 1
      %p100 = scmp.eq.s32.totalorder %s12, 1
      %p101 = scmp.ne.s32.totalorder %s96, %s98
      %p102 = scmp.eq.s32.totalorder %s12, 0
      %p103 = por %p101, %p102
      %p104 = scmp.ne.s32.totalorder %s96, %s98
      %p105 = scmp.eq.s32.totalorder %s17, 1
      %p106 = por %p104, %p105
      %p107 = scmp.ne.s32.totalorder %s98, %s99
      %p108 = scmp.eq.s32.totalorder %s17, 0
      %p109 = por %p107, %p108
      %p110 = scmp.ne.s32.totalorder %s98, %s99
      %p111 = scmp.eq.s32.totalorder %s18, 1
      %p112 = por %p110, %p111
      %p114 = scmp.ne.s32.totalorder %s99, %s113
      %p115 = scmp.eq.s32.totalorder %s18, 0
      %p116 = por %p114, %p115
      %s117 = ssub.s32 %s19, %s31
      %p118 = scmp.eq.s32.totalorder %s117, 0
      %s120 = sadd.s32 %s119, 1
      %s121 = scalar_select %p118, %s119, %s120
      %p124 = pneg %p118
      %p125 = scmp.eq.s32.totalorder %s12, 1
      %p126 = por %p124, %p125
      %p127 = scmp.ne.s32.totalorder %s119, %s122
      %p128 = scmp.eq.s32.totalorder %s12, 0
      %p129 = por %p127, %p128
      %p130 = scmp.ne.s32.totalorder %s119, %s122
      %p131 = scmp.eq.s32.totalorder %s17, 1
      %p132 = por %p130, %p131
      %p133 = scmp.ne.s32.totalorder %s122, %s123
      %p134 = scmp.eq.s32.totalorder %s17, 0
      %p135 = por %p133, %p134
      %p136 = scmp.ne.s32.totalorder %s122, %s123
      %p137 = scmp.eq.s32.totalorder %s18, 1
      %p138 = por %p136, %p137
      %p140 = scmp.ne.s32.totalorder %s123, %s139
      %p141 = scmp.eq.s32.totalorder %s18, 0
      %p142 = por %p140, %p141
      %p143 = scmp.le.s32.totalorder 1, %s12
      %p144 = scmp.lt.s32.totalorder %s12, 3
      %p145 = pnand %p143, %p144
      %p146 = pneg %p145
      // Predicated region
      $region9: #{tpu_custom_call.1} parent=5 // pred_check
        _
      $region10: #{tpu_custom_call.1} parent=5 // pred_check_branch
        %148 = sbr.rel (%p145) target = $region12
      $region11: #{tpu_custom_call.1} parent=5 // pred_region
        %s149 = ssub.s32 %s12, 1
        // Predicated region
        $region13: #{tpu_custom_call.1} parent=11 // pred_check
          %p150 = pneg %p109
        $region14: #{tpu_custom_call.1} parent=11 // pred_check_branch
          %152 = sbr.rel (%p150) target = $region16
        $region15: #{tpu_custom_call.1} parent=11 // pred_region
          _
        $region16: #{tpu_custom_call.1} parent=11 // pred_fallthru
          _
      $region12: #{tpu_custom_call.1} parent=5 // pred_fallthru
        _
      %p153 = scmp.lt.s32.totalorder %s12, 2
      // Predicated region
      $region17: #{tpu_custom_call.1} parent=5 // pred_check
        %p154 = pneg %p153
      $region18: #{tpu_custom_call.1} parent=5 // pred_check_branch
        %156 = sbr.rel (%p154) target = $region20
      $region19: #{tpu_custom_call.1} parent=5 // pred_region
        // Predicated region
        $region21: #{tpu_custom_call.1} parent=19 // pred_check
          %p157 = pneg %p50
        $region22: #{tpu_custom_call.1} parent=19 // pred_check_branch
          %159 = sbr.rel (%p157) target = $region24
        $region23: #{tpu_custom_call.1} parent=19 // pred_region
          %s160 = sadd.s32 %s19, %s20
          %p161 = scmp.lt.s32.totalorder %s160, 0
          %s162 = scalar_select %p161, %s160, 0
          %p163 = scmp.lt.s32.totalorder %s162, 0
          %s164 = scalar_select %p163, %s162, 0
          %s165 = smul.addr %s164, 8
          %s166 = scalar_lea.vmem %s0, %s165
          %s167 = sadd.s32 %s19, %s20
          %p168 = scmp.lt.s32.totalorder %s167, 0
          %s169 = scalar_select %p168, %s167, 0
        $region24: #{tpu_custom_call.1} parent=19 // pred_fallthru
          _
        // Predicated region
        $region25: #{tpu_custom_call.1} parent=19 // pred_check
          %p170 = pneg %p82
        $region26: #{tpu_custom_call.1} parent=19 // pred_check_branch
          %172 = sbr.rel (%p170) target = $region28
        $region27: #{tpu_custom_call.1} parent=19 // pred_region
          %s173 = sadd.s32 %s19, %s20
          %p174 = scmp.lt.s32.totalorder %s173, 0
          %s175 = scalar_select %p174, %s173, 0
          %p176 = scmp.lt.s32.totalorder %s175, 0
          %s177 = scalar_select %p176, %s175, 0
          %s178 = smul.addr %s177, 8
          %s179 = scalar_lea.vmem %s1, %s178
          %s180 = sadd.s32 %s19, %s20
          %p181 = scmp.lt.s32.totalorder %s180, 0
          %s182 = scalar_select %p181, %s180, 0
        $region28: #{tpu_custom_call.1} parent=19 // pred_fallthru
          _
      $region20: #{tpu_custom_call.1} parent=5 // pred_fallthru
        _
      %p183 = scmp.le.s32.totalorder 1, %s12
      %p184 = scmp.lt.s32.totalorder %s12, 3
      %p185 = pnand %p183, %p184
      %p186 = pneg %p185
      // Predicated region
      $region29: #{tpu_custom_call.1} parent=5 // pred_check
        _
      $region30: #{tpu_custom_call.1} parent=5 // pred_check_branch
        %188 = sbr.rel (%p185) target = $region32
      $region31: #{tpu_custom_call.1} parent=5 // pred_region
        %s189 = ssub.s32 %s12, 1
        %s190 = sadd.s32 %s21, %s22
        %p191 = scmp.lt.s32.totalorder %s190, 0
        %s192 = scalar_select %p191, %s190, 0
        %p193 = scmp.lt.s32.totalorder %s192, 0
        %s194 = scalar_select %p193, %s192, 0
        %s195 = smul.addr %s194, 8
        %s196 = scalar_lea.vmem %s0, %s195
        %p197 = pneg %p56
        %p198 = pneg %p53
        %s199 = sadd.s32 %s21, %s22
        %p200 = scmp.lt.s32.totalorder %s199, 0
        %s201 = scalar_select %p200, %s199, 0
        %p202 = scmp.lt.s32.totalorder %s201, 0
        %s203 = scalar_select %p202, %s201, 0
        %s204 = smul.addr %s203, 8
        %s205 = scalar_lea.vmem %s1, %s204
        %p206 = pneg %p88
        %p207 = pneg %p85
        %p208 = pneg %p109
        %p209 = pneg %p106
        %p210 = pneg %p135
        %p211 = pneg %p132
        %s212 = sand.u32 %s122, 1
        %s213 = scalar_lea.sflag [#allocation3], %s212
        %s214 = sand.u32 %s122, 1
        %s215 = smul.addr %s214, 8
        %s216 = scalar_lea.vmem [#allocation2], %s215
        %s217 = sadd.s32 %s21, %s22
        %p218 = scmp.lt.s32.totalorder %s217, 0
        %s219 = scalar_select %p218, %s217, 0
        %p220 = scmp.lt.s32.totalorder %s219, 0
        %s221 = scalar_select %p220, %s219, 0
        %s222 = smul.addr %s221, 8
        %s223 = scalar_lea.vmem %s0, %s222
        %s224 = sadd.s32 %s21, %s22
        %p225 = scmp.lt.s32.totalorder %s224, 0
        %s226 = scalar_select %p225, %s224, 0
        %s227 = sadd.s32 %s21, %s22
        %p228 = scmp.lt.s32.totalorder %s227, 0
        %s229 = scalar_select %p228, %s227, 0
        %p230 = scmp.lt.s32.totalorder %s229, 0
        %s231 = scalar_select %p230, %s229, 0
        %s232 = smul.addr %s231, 8
        %s233 = scalar_lea.vmem %s1, %s232
        %s234 = sadd.s32 %s21, %s22
        %p235 = scmp.lt.s32.totalorder %s234, 0
        %s236 = scalar_select %p235, %s234, 0
        %p237 = scmp.eq.s32.totalorder %s22, 0
        // Predicated region
        $region33: #{tpu_custom_call.1} parent=31 // pred_check
          %p238 = pneg %p237
        $region34: #{tpu_custom_call.1} parent=31 // pred_check_branch
          %240 = sbr.rel (%p238) target = $region36
        $region35: #{tpu_custom_call.1} parent=31 // pred_region
          %241 = vst [vmem:[%s216] sm:$0xff] 0.0
        $region36: #{tpu_custom_call.1} parent=31 // pred_fallthru
          _
        %v242 = vld [vmem:[%s223] sm:$0xff]
        %v243 = vld [vmem:[%s233] sm:$0xff]
        %v244 = vld [vmem:[%s2] sm:$0x1]
        %vm245 = vcmask 130048
        %v246 = vsel %vm245, %v242, -inf
        %247 = vmax.xlane.f32.xlu0 %v246
        %v248 = vpop.xlane.xlu0 %247
        %v249 = vsub.f32 %v242, %v248
        %v250 = vmul.f32 %v249, 1.442695
        %v251 = vpow.pop %v250
        %v252 = vsel %vm245, %v251, 0.0
        %253 = vadd.xlane.f32.xlu0 %v252
        %v254 = vpop.xlane.xlu0 %253
        %v255 = vlaneseq
        %v256 = vand.u32 %v255, 127
        %257 = vset.pattern.permute.xlu0 0
        %258 = vperm.xlu0 %257, %v243
        %v259 = vpop.permute.xlu0 %258
        %vm260 = vcmp.eq.s32.totalorder %v256, %v259
        %v261 = vsel %vm260, 1, 0
        %v262 = vcvt.s32.f32 %v261
        %v263 = vmul.f32 %v251, %v262
        %v264 = vsel %vm245, %v263, 0.0
        %265 = vadd.xlane.f32.xlu0 %v264
        %v266 = vpop.xlane.xlu0 %265
        %v268 = vperm.slane %v244, 0
        %v270 = vmul.f32 %v268, %v262
        %v271 = vsel %vm245, %v270, 0.0
        %272 = vadd.xlane.f32.xlu0 %v271
        %v273 = vpop.xlane.xlu0 %272
        %v274 = vrcp.pop %v254
        %v275 = vmul.f32 %v266, %v274
        %v276 = vadd.f32 %v275, 1e-08
        %v277 = vlog2.pop %v276
        %v278 = vmul.f32 %v277, 0.6931472
        %v279 = vadd.f32 %v278, 1e-08
        %v280 = vsub.f32 1.0, %v276
        %v281 = vmul.f32 %v280, %v280
        %v282 = vsub.f32 0.0, %v273
        %v283 = vmul.f32 %v282, %v281
        %v284 = vmul.f32 %v283, %v279
        %s285 = sadd.s32 %s21, %s22
        %s286 = smul.u32 %s285, 8
        %v287 = vlaneseq
        %v288 = vshrl.u32 %v287, 7
        %v289 = vstv %s286
        %v290 = vadd.s32 %v289, %v288
        %vm291 = vcmp.lt.s32.totalorder %v290, 8
        %v292 = vsel %vm291, %v284, 0.0
        %v293 = vld [vmem:[%s216] sm:$0xff]
        %vm294 = vcmask 7168
        %v295 = vsel %vm294, %v292, 0.0
        %296 = vadd.xlane.f32.xlu0 %v295
        %v297 = vpop.xlane.xlu0 %296
        %v298 = vrot.slane %v297, 4
        %v299 = vadd.f32 %v297, %v298
        %v300 = vrot.slane %v299, 2
        %v301 = vadd.f32 %v299, %v300
        %v302 = vrot.slane %v301, 1
        %v303 = vadd.f32 %v301, %v302
        %s304 = vtos %v303
        %v305 = vstv %s304
        %v306 = vadd.f32 %v293, %v305
        %307 = vst [vmem:[%s216] sm:$0xff] %v306
        %s308 = sand.u32 %s122, 1
        %s309 = scalar_lea.sflag [#allocation3], %s308
        %s310 = sand.u32 %s122, 1
        %s311 = smul.addr %s310, 8
        %s312 = scalar_lea.vmem [#allocation2], %s311
        // Predicated region
        $region37: #{tpu_custom_call.1} parent=31 // pred_check
          %p313 = pneg %p132
        $region38: #{tpu_custom_call.1} parent=31 // pred_check_branch
          %315 = sbr.rel (%p313) target = $region40
        $region39: #{tpu_custom_call.1} parent=31 // pred_region
          %317 = vsyncadd %s309, 0
          %s318 = smul.addr %s21, 8
          %s319 = scalar_lea.hbm %s3, %s318
          %s321 = sshll.u32 %s312, 4
          %s322 = int_to_ptr.vmem [resolvable:$true] %s321
          %s323 = sshll.u32 %s319, 4
          %s324 = int_to_ptr.hbm [resolvable:$true] %s323
          %326 = dma.vmem_to_hbm [thread:$0]  %s322, 128, %s324, %s309
        $region40: #{tpu_custom_call.1} parent=31 // pred_fallthru
          _
      $region32: #{tpu_custom_call.1} parent=5 // pred_fallthru
        _
      %p327 = scmp.le.s32.totalorder 2, %s12
      // Predicated region
      $region41: #{tpu_custom_call.1} parent=5 // pred_check
        %p328 = pneg %p327
      $region42: #{tpu_custom_call.1} parent=5 // pred_check_branch
        %330 = sbr.rel (%p328) target = $region44
      $region43: #{tpu_custom_call.1} parent=5 // pred_region
        %s331 = ssub.s32 %s12, 2
        // Predicated region
        $region45: #{tpu_custom_call.1} parent=43 // pred_check
          %p332 = pneg %p138
        $region46: #{tpu_custom_call.1} parent=43 // pred_check_branch
          %334 = sbr.rel (%p332) target = $region48
        $region47: #{tpu_custom_call.1} parent=43 // pred_region
          %s335 = sand.u32 %s123, 1
          %s336 = scalar_lea.sflag [#allocation3], %s335
          %s337 = sand.u32 %s123, 1
          %s338 = smul.addr %s337, 8
          %s339 = scalar_lea.vmem [#allocation2], %s338
          %341 = dma.done %s336, 128
        $region48: #{tpu_custom_call.1} parent=43 // pred_fallthru
          _
      $region44: #{tpu_custom_call.1} parent=5 // pred_fallthru
        _
    $region6: #{tpu_custom_call.1} parent=1 // loop_footer
      %s16 = sadd.s32 1, %s12
    $region7: #{tpu_custom_call.1} parent=1 // loop_footer_branch
      %11 = sbr.rel target = $region3
    $region8: #{tpu_custom_call.1} parent=1 // loop_exit
      _
    %342 = vsyncpa [#allocation3], 1
    %s343 = scalar_lea.sflag [#allocation3], 1
    %344 = vsyncpa %s343, 1

</llo_original>
